<compile_context>
chip_gen: v5e
topology: v5e:2x2
jax: 0.10.0
libtpu: 0.0.40
codegen_flags: <defaults>
</compile_context>

<pallas_src>
import math

import jax
import jax.numpy as jnp
from jax.experimental import pallas as pl
from jax.experimental.pallas import tpu as pltpu

_INV_SQRT_2PI = 1.0 / math.sqrt(2.0 * math.pi)


def _round_up(x, m):
    return ((x + m - 1) // m) * m


def _tm_cap():
    # Generation-conditional row-tile cap: v7x's ~3.2 TB/s HBM drains a 1 MiB
    # output tile in ~0.3 us, comparable to per-step overhead, so use bigger
    # tiles there.  v5e/v6e are already at their roofline plateau at 2048.
    try:
        kind = jax.devices()[0].device_kind.lower()
    except Exception:
        return 2048
    return 4096 if "v7" in kind else 2048


def _choose_tm(M, cap):
    """Pick a row tile: single block if M fits, else bound padding waste."""
    if M <= cap:
        return _round_up(M, 8)
    tm = cap
    # Shrink while padded-out rows would exceed ~12.5% of M (write-bound kernel:
    # dead rows are pure wasted HBM traffic).
    while tm > 256 and (_round_up(M, tm) - M) * 8 > M:
        tm //= 2
    return tm


# ---------------------------------------------------------------------------
# Pallas kernel:
#   out[m, k] = exp(s[k] * (t[m] - mean[k])^2) * coef[k]
# with (precomputed in the wrapper, K elements each):
#   std[k]  = |stds_weight[k]| + 0.01
#   s[k]    = -0.5 / std[k]^2
#   coef[k] = 1 / (sqrt(2*pi) * std[k])
# ---------------------------------------------------------------------------
def gaussian_layer_kernel(t_ref, mean_ref, s_ref, coef_ref, o_ref):
    t = t_ref[...]            # (TM, 1) f32
    mean = mean_ref[...]      # (1, K)
    s = s_ref[...]            # (1, K)
    coef = coef_ref[...]      # (1, K)

    d = t - mean              # broadcast -> (TM, K)
    o_ref[...] = (jnp.exp(s * (d * d)) * coef).astype(o_ref.dtype)


def gaussian_layer_pallas(t, mean, s, coef, *, K, TM, out_dtype=jnp.float32):
    """t: (M_pad, 1) f32; mean/s/coef: (1, K) f32 -> (M_pad, K) out_dtype."""
    M_pad = t.shape[0]
    assert M_pad % TM == 0  # wrapper guarantees this via padding

    out_bytes = jnp.dtype(out_dtype).itemsize
    cost = pl.CostEstimate(
        flops=4 * M_pad * K,
        transcendentals=M_pad * K,
        bytes_accessed=M_pad * K * out_bytes + M_pad * 4 + 3 * K * 4,
    )

    return pl.pallas_call(
        gaussian_layer_kernel,
        out_shape=jax.ShapeDtypeStruct((M_pad, K), out_dtype),
        grid_spec=pltpu.PrefetchScalarGridSpec(
            num_scalar_prefetch=0,
            grid=(M_pad // TM,),
            in_specs=[
                pl.BlockSpec((TM, 1), lambda i: (i, 0)),   # t = mul*x + bias
                pl.BlockSpec((1, K), lambda i: (0, 0)),    # means
                pl.BlockSpec((1, K), lambda i: (0, 0)),    # -0.5 / std^2
                pl.BlockSpec((1, K), lambda i: (0, 0)),    # 1 / (sqrt(2pi)*std)
            ],
            out_specs=pl.BlockSpec((TM, K), lambda i: (i, 0)),
        ),
        compiler_params=pltpu.CompilerParams(
            # NOTE: "parallel" vs "arbitrary" barely changes codegen; 2-TC
            # sharding on v7x would need CORE_PARALLEL / core_map and a trace
            # to confirm a benefit.  Kept simple and safe here.
            dimension_semantics=("parallel",),
        ),
        cost_estimate=cost,
    )(t, mean, s, coef)


# ---------------------------------------------------------------------------
# Module wrapper: parameters + forward (embedding-gather glue in JAX,
# elementwise hot path in Pallas)
# ---------------------------------------------------------------------------
class GaussianLayerPallas:
    def __init__(self, K=128, edge_types=512 * 3, key=None):
        self.K = K
        self.num_edge_types = edge_types
        if key is None:
            key = jax.random.PRNGKey(0)
        k_means, k_stds = jax.random.split(key)
        # nn.init.uniform_(means.weight, 0, 3); nn.init.uniform_(stds.weight, 0, 3)
        self.means_weight = jax.random.uniform(
            k_means, (1, K), dtype=jnp.float32, minval=0.0, maxval=3.0)
        self.stds_weight = jax.random.uniform(
            k_stds, (1, K), dtype=jnp.float32, minval=0.0, maxval=3.0)
        # nn.init.constant_(mul.weight, 1); nn.init.constant_(bias.weight, 0)
        # (constant_ runs after padding_idx zeroing, so row 0 is also 1 / 0.)
        self.mul_weight = jnp.ones((edge_types, 1), dtype=jnp.float32)
        self.bias_weight = jnp.zeros((edge_types, 1), dtype=jnp.float32)

    def __call__(self, x, edge_types, out_dtype=None):
        # x: (B, N, N) float; edge_types: (B, N, N, E) int
        B, N1, N2 = x.shape
        K = self.K
        if out_dtype is None:
            out_dtype = self.means_weight.dtype  # .type_as(self.means.weight)

        # Embedding lookups + sum over dim=-2, then the affine transform.
        # These fuse into one small XLA op; only the (M,1) result hits the kernel.
        mul = jnp.take(self.mul_weight, edge_types, axis=0).sum(axis=-2)    # (B,N,N,1)
        bias = jnp.take(self.bias_weight, edge_types, axis=0).sum(axis=-2)  # (B,N,N,1)
        t = (mul * x[..., None].astype(jnp.float32) + bias).astype(jnp.float32)

        M = B * N1 * N2
        t = t.reshape(M, 1)

        # Fold per-k constants once (K = 128 elements, negligible).
        std = jnp.abs(self.stds_weight.astype(jnp.float32)) + 0.01          # (1, K)
        s = -0.5 / (std * std)                                              # (1, K)
        coef = _INV_SQRT_2PI / std                                          # (1, K)
        mean = self.means_weight.astype(jnp.float32)                        # (1, K)

        TM = _choose_tm(M, _tm_cap())
        M_pad = _round_up(M, TM)
        if M_pad != M:
            t = jnp.pad(t, ((0, M_pad - M), (0, 0)))

        out = gaussian_layer_pallas(t, mean, s, coef, K=K, TM=TM,
                                    out_dtype=out_dtype)
        return out[:M].reshape(B, N1, N2, K)


# ---------------------------------------------------------------------------
# Pure-JAX reference of the PyTorch forward (for correctness check)
# ---------------------------------------------------------------------------
def reference_forward(layer, x, edge_types):
    mul = jnp.take(layer.mul_weight, edge_types, axis=0).sum(axis=-2)
    bias = jnp.take(layer.bias_weight, edge_types, axis=0).sum(axis=-2)
    xx = mul * x[..., None] + bias                               # (B,N,N,1)
    xx = jnp.broadcast_to(xx, xx.shape[:-1] + (layer.K,))        # (B,N,N,K)
    mean = layer.means_weight.reshape(-1)
    std = jnp.abs(layer.stds_weight.reshape(-1)) + 0.01
    a = math.sqrt(2.0 * math.pi)
    return (jnp.exp(-0.5 * ((xx.astype(jnp.float32) - mean) / std) ** 2)
            / (a * std)).astype(layer.means_weight.dtype)


if __name__ == "__main__":
    key = jax.random.PRNGKey(0)
    k_param, k_x, k_e, k_x2, k_e2, k_x3, k_e3 = jax.random.split(key, 7)

    K = 128
    layer = GaussianLayerPallas(K=K, edge_types=512 * 3, key=k_param)

    # Case 1: small "nice" shape (M = 128, single grid step).
    B, N, E = 2, 8, 2
    x = jax.random.uniform(k_x, (B, N, N), dtype=jnp.float32, minval=0.0, maxval=5.0)
    edge_types = jax.random.randint(k_e, (B, N, N, E), 0, 512 * 3, dtype=jnp.int32)
    out = jax.block_until_ready(layer(x, edge_types))
    ref = reference_forward(layer, x, edge_types)
    assert out.shape == (B, N, N, K)
    assert out.dtype == jnp.float32
    assert jnp.allclose(out, ref, atol=1e-5, rtol=1e-5), "mismatch vs reference (case 1)"

    # Case 2: awkward shape (M = 36, exercises the padding path).
    B2, N2_, E2 = 1, 6, 3
    x2 = jax.random.uniform(k_x2, (B2, N2_, N2_), dtype=jnp.float32, minval=0.0, maxval=5.0)
    edge_types2 = jax.random.randint(k_e2, (B2, N2_, N2_, E2), 0, 512 * 3, dtype=jnp.int32)
    out2 = jax.block_until_ready(layer(x2, edge_types2))
    ref2 = reference_forward(layer, x2, edge_types2)
    assert out2.shape == (B2, N2_, N2_, K)
    assert jnp.allclose(out2, ref2, atol=1e-5, rtol=1e-5), "mismatch vs reference (case 2)"

    # Case 3: M > tile cap (M = 2592) -> multi-step grid + adaptive tile choice.
    B3, N3, E3 = 2, 36, 2
    x3 = jax.random.uniform(k_x3, (B3, N3, N3), dtype=jnp.float32, minval=0.0, maxval=5.0)
    edge_types3 = jax.random.randint(k_e3, (B3, N3, N3, E3), 0, 512 * 3, dtype=jnp.int32)
    out3 = jax.block_until_ready(layer(x3, edge_types3))
    ref3 = reference_forward(layer, x3, edge_types3)
    assert out3.shape == (B3, N3, N3, K)
    assert jnp.allclose(out3, ref3, atol=1e-5, rtol=1e-5), "mismatch vs reference (case 3)"

    print("KERNEL_OK")
</pallas_src>

<mosaic_0001>
module attributes {stable_mosaic.version = 11 : i64} {
  func.func @gaussian_layer_kernel(%arg0: i32, %arg1: memref<128x1xf32, #tpu.memory_space<vmem>>, %arg2: memref<1x128xf32, #tpu.memory_space<vmem>>, %arg3: memref<1x128xf32, #tpu.memory_space<vmem>>, %arg4: memref<1x128xf32, #tpu.memory_space<vmem>>, %arg5: memref<128x128xf32, #tpu.memory_space<vmem>>) attributes {dimension_semantics = [#tpu.dimension_semantics<parallel>], iteration_bounds = array<i64: 1>, scalar_prefetch = 0 : i64, scratch_operands = 0 : i64, tpu.core_type = #tpu.core_type<tc>, window_params = [{transform_indices = @transform_0, window_bounds = array<i64: 128, 1>}, {pipeline_mode = #tpu.pipeline_mode<synchronous>, transform_indices = @transform_1, window_bounds = array<i64: 1, 128>}, {pipeline_mode = #tpu.pipeline_mode<synchronous>, transform_indices = @transform_2, window_bounds = array<i64: 1, 128>}, {pipeline_mode = #tpu.pipeline_mode<synchronous>, transform_indices = @transform_3, window_bounds = array<i64: 1, 128>}, {transform_indices = @transform_4, window_bounds = array<i64: 128, 128>}]} {
    %c0 = arith.constant 0 : index
    %c0_0 = arith.constant 0 : index
    %0 = vector.load %arg1[%c0, %c0_0] : memref<128x1xf32, #tpu.memory_space<vmem>>, vector<128x1xf32>
    %c0_1 = arith.constant 0 : index
    %c0_2 = arith.constant 0 : index
    %1 = vector.load %arg2[%c0_1, %c0_2] : memref<1x128xf32, #tpu.memory_space<vmem>>, vector<1x128xf32>
    %c0_3 = arith.constant 0 : index
    %c0_4 = arith.constant 0 : index
    %2 = vector.load %arg3[%c0_3, %c0_4] : memref<1x128xf32, #tpu.memory_space<vmem>>, vector<1x128xf32>
    %c0_5 = arith.constant 0 : index
    %c0_6 = arith.constant 0 : index
    %3 = vector.load %arg4[%c0_5, %c0_6] : memref<1x128xf32, #tpu.memory_space<vmem>>, vector<1x128xf32>
    %4 = vector.broadcast %0 : vector<128x1xf32> to vector<128x128xf32>
    %5 = vector.broadcast %1 : vector<1x128xf32> to vector<128x128xf32>
    %6 = arith.subf %4, %5 : vector<128x128xf32>
    %7 = arith.mulf %6, %6 : vector<128x128xf32>
    %8 = vector.broadcast %2 : vector<1x128xf32> to vector<128x128xf32>
    %9 = arith.mulf %8, %7 : vector<128x128xf32>
    %10 = math.exp %9 : vector<128x128xf32>
    %11 = vector.broadcast %3 : vector<1x128xf32> to vector<128x128xf32>
    %12 = arith.mulf %10, %11 : vector<128x128xf32>
    %c0_7 = arith.constant 0 : index
    %c0_8 = arith.constant 0 : index
    %13 = vector.load %arg5[%c0_7, %c0_8] : memref<128x128xf32, #tpu.memory_space<vmem>>, vector<128x128xf32>
    tpu.vector_store %arg5[%c0_7, %c0_8], %12 {strides = array<i32>} : memref<128x128xf32, #tpu.memory_space<vmem>>, vector<128x128xf32>,
    return
  }
  func.func @transform_0(%arg0: i32) -> (i32, i32) {
    %c0_i32 = arith.constant 0 : i32
    %c0_i32_0 = arith.constant 0 : i32
    return %arg0, %c0_i32 : i32, i32
  }
  func.func @transform_1(%arg0: i32) -> (i32, i32) {
    %c0_i32 = arith.constant 0 : i32
    %c0_i32_0 = arith.constant 0 : i32
    %c0_i32_1 = arith.constant 0 : i32
    return %c0_i32, %c0_i32_0 : i32, i32
  }
  func.func @transform_2(%arg0: i32) -> (i32, i32) {
    %c0_i32 = arith.constant 0 : i32
    %c0_i32_0 = arith.constant 0 : i32
    %c0_i32_1 = arith.constant 0 : i32
    return %c0_i32, %c0_i32_0 : i32, i32
  }
  func.func @transform_3(%arg0: i32) -> (i32, i32) {
    %c0_i32 = arith.constant 0 : i32
    %c0_i32_0 = arith.constant 0 : i32
    %c0_i32_1 = arith.constant 0 : i32
    return %c0_i32, %c0_i32_0 : i32, i32
  }
  func.func @transform_4(%arg0: i32) -> (i32, i32) {
    %c0_i32 = arith.constant 0 : i32
    %c0_i32_0 = arith.constant 0 : i32
    return %arg0, %c0_i32 : i32, i32
  }
}

</mosaic_0001>

<llo_original>
// kernel: tpu_custom_call.1
$region0: #{tpu_custom_call.1}
  #allocation0 [shape = 'u32[]', space=smem, size = 0x4, offset = 0x4, fixed_abs, tag = 'smem constant byte address 0x4 - core index']
  #allocation1 [shape = 'u32[72,128]{1,0:T(1,128)}', space=vmem, size = 0x9000, scoped, tag = 'internal scratch']
  %s0 = inlined_call_operand.vmem [shape: f32[128,1], index: 0, kind: input, shape index: {}]
  %s1 = inlined_call_operand.vmem [shape: f32[1,128], index: 1, kind: input, shape index: {}]
  %s2 = inlined_call_operand.vmem [shape: f32[1,128], index: 2, kind: input, shape index: {}]
  %s3 = inlined_call_operand.vmem [shape: f32[1,128], index: 3, kind: input, shape index: {}]
  %s4 = inlined_call_operand.hbm [shape: f32[128,128], index: 4, kind: output, shape index: {}]
  %s5 = sld [smem:[#allocation0]]
  $region26: #{tpu_custom_call.1} parent=0
    _
  %s7 = ssub.s32 1, %s5
  %s8 = scalar_select 0, %s7, %s5
  $region1: #{tpu_custom_call.1} parent=0
    #allocation2 [shape = 'u8[65536]{0}', space=vmem, size = 0x10000, scoped, tag = 'output window, operand 0, single buffered']
    #allocation3 [shape = 's32[1]{0}', space=sflag, size = 0x4, scoped, tag = 'scoped memory for tpu_custom_call.1']
    %9 = vsyncpa [#allocation3], 0
    // Predicated region
    $region2: #{tpu_custom_call.1} parent=1 // pred_check
      _
    $region3: #{tpu_custom_call.1} parent=1 // pred_check_branch
      %11 = sbr.rel (0) target = $region5
    $region4: #{tpu_custom_call.1} parent=1 // pred_region
      _
    $region5: #{tpu_custom_call.1} parent=1 // pred_fallthru
      _
    // Predicated region
    $region6: #{tpu_custom_call.1} parent=1 // pred_check
      _
    $region7: #{tpu_custom_call.1} parent=1 // pred_check_branch
      %13 = sbr.rel (0) target = $region9
    $region8: #{tpu_custom_call.1} parent=1 // pred_region
      _
    $region9: #{tpu_custom_call.1} parent=1 // pred_fallthru
      _
    // Predicated region
    $region10: #{tpu_custom_call.1} parent=1 // pred_check
      _
    $region11: #{tpu_custom_call.1} parent=1 // pred_check_branch
      %15 = sbr.rel (0) target = $region13
    $region12: #{tpu_custom_call.1} parent=1 // pred_region
      _
    $region13: #{tpu_custom_call.1} parent=1 // pred_fallthru
      _
    // Predicated region
    $region14: #{tpu_custom_call.1} parent=1 // pred_check
      _
    $region15: #{tpu_custom_call.1} parent=1 // pred_check_branch
      %17 = sbr.rel (0) target = $region17
    $region16: #{tpu_custom_call.1} parent=1 // pred_region
      _
    $region17: #{tpu_custom_call.1} parent=1 // pred_fallthru
      _
    %v18 = vld [vmem:[%s0] sm:$0xff]
    %v19 = vld [vmem:[%s0 + $0x8] sm:$0xff]
    %v20 = vld [vmem:[%s0 + $0x10] sm:$0xff]
    %v21 = vld [vmem:[%s0 + $0x18] sm:$0xff]
    %v22 = vld [vmem:[%s0 + $0x20] sm:$0xff]
    %v23 = vld [vmem:[%s0 + $0x28] sm:$0xff]
    %v24 = vld [vmem:[%s0 + $0x30] sm:$0xff]
    %v25 = vld [vmem:[%s0 + $0x38] sm:$0xff]
    %v26 = vld [vmem:[%s0 + $0x40] sm:$0xff]
    %v27 = vld [vmem:[%s0 + $0x48] sm:$0xff]
    %v28 = vld [vmem:[%s0 + $0x50] sm:$0xff]
    %v29 = vld [vmem:[%s0 + $0x58] sm:$0xff]
    %v30 = vld [vmem:[%s0 + $0x60] sm:$0xff]
    %v31 = vld [vmem:[%s0 + $0x68] sm:$0xff]
    %v32 = vld [vmem:[%s0 + $0x70] sm:$0xff]
    %v33 = vld [vmem:[%s0 + $0x78] sm:$0xff]
    %v34 = vld [vmem:[%s1] sm:$0x1]
    %v35 = vld [vmem:[%s2] sm:$0x1]
    %v36 = vld [vmem:[%s3] sm:$0x1]
    %38 = vset.pattern.permute.xlu0 0
    %39 = vperm.xlu0 %38, %v18
    %v40 = vpop.permute.xlu0 %39
    %43 = vset.pattern.permute.xlu0 0
    %44 = vperm.xlu0 %43, %v19
    %v45 = vpop.permute.xlu0 %44
    %48 = vset.pattern.permute.xlu0 0
    %49 = vperm.xlu0 %48, %v20
    %v50 = vpop.permute.xlu0 %49
    %53 = vset.pattern.permute.xlu0 0
    %54 = vperm.xlu0 %53, %v21
    %v55 = vpop.permute.xlu0 %54
    %58 = vset.pattern.permute.xlu0 0
    %59 = vperm.xlu0 %58, %v22
    %v60 = vpop.permute.xlu0 %59
    %63 = vset.pattern.permute.xlu0 0
    %64 = vperm.xlu0 %63, %v23
    %v65 = vpop.permute.xlu0 %64
    %68 = vset.pattern.permute.xlu0 0
    %69 = vperm.xlu0 %68, %v24
    %v70 = vpop.permute.xlu0 %69
    %73 = vset.pattern.permute.xlu0 0
    %74 = vperm.xlu0 %73, %v25
    %v75 = vpop.permute.xlu0 %74
    %78 = vset.pattern.permute.xlu0 0
    %79 = vperm.xlu0 %78, %v26
    %v80 = vpop.permute.xlu0 %79
    %83 = vset.pattern.permute.xlu0 0
    %84 = vperm.xlu0 %83, %v27
    %v85 = vpop.permute.xlu0 %84
    %88 = vset.pattern.permute.xlu0 0
    %89 = vperm.xlu0 %88, %v28
    %v90 = vpop.permute.xlu0 %89
    %93 = vset.pattern.permute.xlu0 0
    %94 = vperm.xlu0 %93, %v29
    %v95 = vpop.permute.xlu0 %94
    %98 = vset.pattern.permute.xlu0 0
    %99 = vperm.xlu0 %98, %v30
    %v100 = vpop.permute.xlu0 %99
    %103 = vset.pattern.permute.xlu0 0
    %104 = vperm.xlu0 %103, %v31
    %v105 = vpop.permute.xlu0 %104
    %108 = vset.pattern.permute.xlu0 0
    %109 = vperm.xlu0 %108, %v32
    %v110 = vpop.permute.xlu0 %109
    %113 = vset.pattern.permute.xlu0 0
    %114 = vperm.xlu0 %113, %v33
    %v115 = vpop.permute.xlu0 %114
    %v118 = vperm.slane %v34, 0
    %v120 = vsub.f32 %v40, %v118
    %v121 = vsub.f32 %v45, %v118
    %v122 = vsub.f32 %v50, %v118
    %v123 = vsub.f32 %v55, %v118
    %v124 = vsub.f32 %v60, %v118
    %v125 = vsub.f32 %v65, %v118
    %v126 = vsub.f32 %v70, %v118
    %v127 = vsub.f32 %v75, %v118
    %v128 = vsub.f32 %v80, %v118
    %v129 = vsub.f32 %v85, %v118
    %v130 = vsub.f32 %v90, %v118
    %v131 = vsub.f32 %v95, %v118
    %v132 = vsub.f32 %v100, %v118
    %v133 = vsub.f32 %v105, %v118
    %v134 = vsub.f32 %v110, %v118
    %v135 = vsub.f32 %v115, %v118
    %v136 = vmul.f32 %v120, %v120
    %v137 = vmul.f32 %v121, %v121
    %v138 = vmul.f32 %v122, %v122
    %v139 = vmul.f32 %v123, %v123
    %v140 = vmul.f32 %v124, %v124
    %v141 = vmul.f32 %v125, %v125
    %v142 = vmul.f32 %v126, %v126
    %v143 = vmul.f32 %v127, %v127
    %v144 = vmul.f32 %v128, %v128
    %v145 = vmul.f32 %v129, %v129
    %v146 = vmul.f32 %v130, %v130
    %v147 = vmul.f32 %v131, %v131
    %v148 = vmul.f32 %v132, %v132
    %v149 = vmul.f32 %v133, %v133
    %v150 = vmul.f32 %v134, %v134
    %v151 = vmul.f32 %v135, %v135
    %v153 = vperm.slane %v35, 0
    %v155 = vmul.f32 %v153, %v136
    %v156 = vmul.f32 %v153, %v137
    %v157 = vmul.f32 %v153, %v138
    %v158 = vmul.f32 %v153, %v139
    %v159 = vmul.f32 %v153, %v140
    %v160 = vmul.f32 %v153, %v141
    %v161 = vmul.f32 %v153, %v142
    %v162 = vmul.f32 %v153, %v143
    %v163 = vmul.f32 %v153, %v144
    %v164 = vmul.f32 %v153, %v145
    %v165 = vmul.f32 %v153, %v146
    %v166 = vmul.f32 %v153, %v147
    %v167 = vmul.f32 %v153, %v148
    %v168 = vmul.f32 %v153, %v149
    %v169 = vmul.f32 %v153, %v150
    %v170 = vmul.f32 %v153, %v151
    %v171 = vmul.f32 %v155, 1.442695
    %v172 = vpow.pop %v171
    %v173 = vmul.f32 %v156, 1.442695
    %v174 = vpow.pop %v173
    %v175 = vmul.f32 %v157, 1.442695
    %v176 = vpow.pop %v175
    %v177 = vmul.f32 %v158, 1.442695
    %v178 = vpow.pop %v177
    %v179 = vmul.f32 %v159, 1.442695
    %v180 = vpow.pop %v179
    %v181 = vmul.f32 %v160, 1.442695
    %v182 = vpow.pop %v181
    %v183 = vmul.f32 %v161, 1.442695
    %v184 = vpow.pop %v183
    %v185 = vmul.f32 %v162, 1.442695
    %v186 = vpow.pop %v185
    %v187 = vmul.f32 %v163, 1.442695
    %v188 = vpow.pop %v187
    %v189 = vmul.f32 %v164, 1.442695
    %v190 = vpow.pop %v189
    %v191 = vmul.f32 %v165, 1.442695
    %v192 = vpow.pop %v191
    %v193 = vmul.f32 %v166, 1.442695
    %v194 = vpow.pop %v193
    %v195 = vmul.f32 %v167, 1.442695
    %v196 = vpow.pop %v195
    %v197 = vmul.f32 %v168, 1.442695
    %v198 = vpow.pop %v197
    %v199 = vmul.f32 %v169, 1.442695
    %v200 = vpow.pop %v199
    %v201 = vmul.f32 %v170, 1.442695
    %v202 = vpow.pop %v201
    %v204 = vperm.slane %v36, 0
    %v206 = vmul.f32 %v172, %v204
    %v207 = vmul.f32 %v174, %v204
    %v208 = vmul.f32 %v176, %v204
    %v209 = vmul.f32 %v178, %v204
    %v210 = vmul.f32 %v180, %v204
    %v211 = vmul.f32 %v182, %v204
    %v212 = vmul.f32 %v184, %v204
    %v213 = vmul.f32 %v186, %v204
    %v214 = vmul.f32 %v188, %v204
    %v215 = vmul.f32 %v190, %v204
    %v216 = vmul.f32 %v192, %v204
    %v217 = vmul.f32 %v194, %v204
    %v218 = vmul.f32 %v196, %v204
    %v219 = vmul.f32 %v198, %v204
    %v220 = vmul.f32 %v200, %v204
    %v221 = vmul.f32 %v202, %v204
    %222 = vst [vmem:[#allocation2] sm:$0xff] %v206
    %223 = vst [vmem:[#allocation2 + $0x8] sm:$0xff] %v207
    %224 = vst [vmem:[#allocation2 + $0x10] sm:$0xff] %v208
    %225 = vst [vmem:[#allocation2 + $0x18] sm:$0xff] %v209
    %226 = vst [vmem:[#allocation2 + $0x20] sm:$0xff] %v210
    %227 = vst [vmem:[#allocation2 + $0x28] sm:$0xff] %v211
    %228 = vst [vmem:[#allocation2 + $0x30] sm:$0xff] %v212
    %229 = vst [vmem:[#allocation2 + $0x38] sm:$0xff] %v213
    %230 = vst [vmem:[#allocation2 + $0x40] sm:$0xff] %v214
    %231 = vst [vmem:[#allocation2 + $0x48] sm:$0xff] %v215
    %232 = vst [vmem:[#allocation2 + $0x50] sm:$0xff] %v216
    %233 = vst [vmem:[#allocation2 + $0x58] sm:$0xff] %v217
    %234 = vst [vmem:[#allocation2 + $0x60] sm:$0xff] %v218
    %235 = vst [vmem:[#allocation2 + $0x68] sm:$0xff] %v219
    %236 = vst [vmem:[#allocation2 + $0x70] sm:$0xff] %v220
    %237 = vst [vmem:[#allocation2 + $0x78] sm:$0xff] %v221
    // Predicated region
    $region18: #{tpu_custom_call.1} parent=1 // pred_check
      _
    $region19: #{tpu_custom_call.1} parent=1 // pred_check_branch
      %239 = sbr.rel (0) target = $region21
    $region20: #{tpu_custom_call.1} parent=1 // pred_region
      %241 = vsyncadd [#allocation3], 0
      %s242 = sshll.u32 [#allocation2], 4
      %s243 = int_to_ptr.vmem [resolvable:$true] %s242
      %s244 = sshll.u32 %s4, 4
      %s245 = int_to_ptr.hbm [resolvable:$true] %s244
      %250 = dma.vmem_to_hbm [thread:$0]  %s243, 2048, %s245, [#allocation3], 128, 128, 8
    $region21: #{tpu_custom_call.1} parent=1 // pred_fallthru
      _
    // Predicated region
    $region22: #{tpu_custom_call.1} parent=1 // pred_check
      _
    $region23: #{tpu_custom_call.1} parent=1 // pred_check_branch
      %252 = sbr.rel (0) target = $region25
    $region24: #{tpu_custom_call.1} parent=1 // pred_region
      %254 = dma.done [#allocation3], 2048
    $region25: #{tpu_custom_call.1} parent=1 // pred_fallthru
      _
    %255 = vsyncpa [#allocation3], 1

</llo_original>
